<compile_context>
chip_gen: v7x
topology: tpu7x:2x2x1
jax: 0.10.0
libtpu: 0.0.40
codegen_flags: <defaults>
</compile_context>

<pallas_src>
import jax
import jax.numpy as jnp
from jax.experimental import pallas as pl
from jax.experimental.pallas import tpu as pltpu


def _round_up(x, m):
    return (x + m - 1) // m * m


def _downsample_a_kernel(sel_ref, x_ref, o_ref):
    """One grid step.

    sel_ref: (H*W, Ho*Wo)         resident one-hot stride-2 selection matrix
    x_ref:   (b_blk*C, H*W)       lane-dense input (one row per (image, channel))
    o_ref:   (b_blk, 2, C, Ho*Wo) half 0 = pooled data, half 1 = zeros
    """
    b_blk, _, C, HoWo = o_ref.shape
    # Stride-2 spatial subsample as a single lane-dense matmul on the MXU.
    # HIGHEST precision = multi-pass f32 -> the one-hot selection stays exact.
    z = jnp.dot(x_ref[...], sel_ref[...],
                precision=jax.lax.Precision.HIGHEST,
                preferred_element_type=jnp.float32)
    # (b_blk*C, HoWo) -> (b_blk, C, HoWo): tile-aligned relabel when C % 8 == 0.
    z = z.reshape(b_blk, C, HoWo).astype(o_ref.dtype)
    o_ref[:, 0, :, :] = z
    o_ref[:, 1, :, :] = jnp.zeros((b_blk, C, HoWo), o_ref.dtype)


def _pick_block(N, C, HW, HoWo, itemsize, sublane):
    """Images per grid step, with padding- and double-buffer-aware VMEM math."""
    budget = 8 << 20  # ~8 MiB live footprint: safe under v5e/v6e/v7x scoped defaults

    def footprint(b):
        in_b = _round_up(b * C, sublane) * _round_up(HW, 128) * itemsize
        out_b = b * 2 * _round_up(C, sublane) * _round_up(HoWo, 128) * itemsize
        sel_b = _round_up(HW, sublane) * _round_up(HoWo, 128) * itemsize
        return 2 * (in_b + out_b + sel_b)  # x2: double-buffered pipeline

    # b must divide N; the (b*C, HW) input block needs sublane-aligned rows
    # (or be the full array) to satisfy the (8, 128) block rule.
    cands = [b for b in range(1, N + 1)
             if N % b == 0 and ((b * C) % sublane == 0 or b == N)]
    fitting = [b for b in cands if footprint(b) <= budget]
    if not fitting:
        fitting = [min(cands, key=footprint)]
    best = max(fitting)
    # Prefer an even grid length (v7x megacore) unless blocks would halve.
    even = [b for b in fitting if (N // b) % 2 == 0]
    if even and 2 * max(even) >= best:
        best = max(even)
    return best, footprint(best)


def downsample_a(x_nchw):
    """DownsampleA forward: AvgPool2d(k=1, stride=2) then cat((x, 0*x), dim=1).

    x_nchw: (N, C, H, W) -> (N, 2*C, ceil(H/2), ceil(W/2)), same dtype.
    """
    N, C, H, W = x_nchw.shape
    Ho = (H - 1) // 2 + 1          # PyTorch AvgPool2d output size
    Wo = (W - 1) // 2 + 1
    HW, HoWo = H * W, Ho * Wo
    dtype = x_nchw.dtype
    itemsize = jnp.dtype(dtype).itemsize
    sublane = max(8, 32 // itemsize)

    # Lane-dense view of the contiguous NCHW input: free reshape.
    x2 = x_nchw.reshape(N * C, HW)

    # One-hot selection matrix: sel[h*W + w, ho*Wo + wo] = 1 iff h==2*ho, w==2*wo.
    rows = jnp.arange(HW, dtype=jnp.int32)
    cols = jnp.arange(HoWo, dtype=jnp.int32)
    sel = ((rows[:, None] // W == 2 * (cols[None, :] // Wo)) &
           (rows[:, None] % W == 2 * (cols[None, :] % Wo))).astype(dtype)

    b_blk, fp_bytes = _pick_block(N, C, HW, HoWo, itemsize, sublane)
    grid = (N // b_blk,)

    compiler_kwargs = dict(dimension_semantics=("parallel",))
    if fp_bytes > (12 << 20):  # only if forced: raise the scoped-VMEM limit
        compiler_kwargs["vmem_limit_bytes"] = int(fp_bytes + (2 << 20))

    out4 = pl.pallas_call(
        _downsample_a_kernel,
        out_shape=jax.ShapeDtypeStruct((N, 2, C, HoWo), dtype),
        grid_spec=pltpu.PrefetchScalarGridSpec(
            num_scalar_prefetch=0,
            grid=grid,
            in_specs=[
                # sel: constant block index -> DMA'd once, stays VMEM-resident.
                pl.BlockSpec((HW, HoWo), lambda n: (0, 0)),
                pl.BlockSpec((b_blk * C, HW), lambda n: (n, 0)),
            ],
            out_specs=pl.BlockSpec((b_blk, 2, C, HoWo), lambda n: (n, 0, 0, 0)),
        ),
        compiler_params=pltpu.CompilerParams(**compiler_kwargs),
    )(sel, x2)

    # Free reshape of the contiguous output back to NCHW: (N, 2C, Ho, Wo).
    return out4.reshape(N, 2 * C, Ho, Wo)


if __name__ == "__main__":
    key = jax.random.PRNGKey(0)
    # Small, tile-friendly DownsampleA config (CIFAR ResNet uses C in {16, 32}).
    N, C, H, W = 2, 8, 16, 16
    x = jax.random.normal(key, (N, C, H, W), dtype=jnp.float32)

    out = jax.block_until_ready(downsample_a(x))

    # Pure-JAX reference of the PyTorch forward.
    pooled = x[:, :, ::2, ::2]
    ref = jnp.concatenate([pooled, jnp.zeros_like(pooled)], axis=1)

    assert out.shape == (N, 2 * C, H // 2, W // 2), out.shape
    assert out.dtype == x.dtype
    assert jnp.allclose(out, ref, rtol=5e-3, atol=1e-5), "mismatch vs reference"

    print("KERNEL_OK")
</pallas_src>

<mosaic_0001>
module attributes {stable_mosaic.version = 11 : i64} {
  func.func @_downsample_a_kernel(%arg0: i32, %arg1: memref<256x64xf32, #tpu.memory_space<vmem>>, %arg2: memref<8x256xf32, #tpu.memory_space<vmem>>, %arg3: memref<1x2x8x64xf32, #tpu.memory_space<vmem>>) attributes {dimension_semantics = [#tpu.dimension_semantics<parallel>], iteration_bounds = array<i64: 2>, scalar_prefetch = 0 : i64, scratch_operands = 0 : i64, tpu.core_type = #tpu.core_type<tc>, window_params = [{pipeline_mode = #tpu.pipeline_mode<synchronous>, transform_indices = @transform_0, window_bounds = array<i64: 256, 64>}, {transform_indices = @transform_1, window_bounds = array<i64: 8, 256>}, {transform_indices = @transform_2, window_bounds = array<i64: 1, 2, 8, 64>}]} {
    %c0 = arith.constant 0 : index
    %c0_0 = arith.constant 0 : index
    %0 = vector.load %arg2[%c0, %c0_0] : memref<8x256xf32, #tpu.memory_space<vmem>>, vector<8x256xf32>
    %c0_1 = arith.constant 0 : index
    %c0_2 = arith.constant 0 : index
    %1 = vector.load %arg1[%c0_1, %c0_2] : memref<256x64xf32, #tpu.memory_space<vmem>>, vector<256x64xf32>
    %cst = arith.constant dense<0.000000e+00> : vector<8x64xf32>
    %2 = tpu.matmul %0, %1, %cst {dimension_numbers = #tpu.dot_dimension_numbers<[1], [0], [0], [1], [0, 0, 1, 1], [], []>, precision = #tpu.contract_precision<fp32>} : vector<8x256xf32>, vector<256x64xf32>, vector<8x64xf32> -> vector<8x64xf32>
    %3 = vector.shape_cast %2 : vector<8x64xf32> to vector<1x8x64xf32>
    %c0_3 = arith.constant 0 : index
    %c0_4 = arith.constant 0 : index
    %c0_5 = arith.constant 0 : index
    %c0_6 = arith.constant 0 : index
    %4 = vector.load %arg3[%c0_3, %c0_4, %c0_5, %c0_6] : memref<1x2x8x64xf32, #tpu.memory_space<vmem>>, vector<1x1x8x64xf32>
    %5 = vector.shape_cast %4 : vector<1x1x8x64xf32> to vector<1x8x64xf32>
    %6 = vector.shape_cast %3 : vector<1x8x64xf32> to vector<1x1x8x64xf32>
    tpu.vector_store %arg3[%c0_3, %c0_4, %c0_5, %c0_6], %6 {strides = array<i32>} : memref<1x2x8x64xf32, #tpu.memory_space<vmem>>, vector<1x1x8x64xf32>,
    %cst_7 = arith.constant 0.000000e+00 : f32
    %7 = vector.broadcast %cst_7 : f32 to vector<1x8x64xf32>
    %c0_8 = arith.constant 0 : index
    %c1 = arith.constant 1 : index
    %c0_9 = arith.constant 0 : index
    %c0_10 = arith.constant 0 : index
    %8 = vector.load %arg3[%c0_8, %c1, %c0_9, %c0_10] : memref<1x2x8x64xf32, #tpu.memory_space<vmem>>, vector<1x1x8x64xf32>
    %9 = vector.shape_cast %8 : vector<1x1x8x64xf32> to vector<1x8x64xf32>
    %10 = vector.shape_cast %7 : vector<1x8x64xf32> to vector<1x1x8x64xf32>
    tpu.vector_store %arg3[%c0_8, %c1, %c0_9, %c0_10], %10 {strides = array<i32>} : memref<1x2x8x64xf32, #tpu.memory_space<vmem>>, vector<1x1x8x64xf32>,
    return
  }
  func.func @transform_0(%arg0: i32) -> (i32, i32) {
    %c0_i32 = arith.constant 0 : i32
    %c0_i32_0 = arith.constant 0 : i32
    %c0_i32_1 = arith.constant 0 : i32
    return %c0_i32, %c0_i32_0 : i32, i32
  }
  func.func @transform_1(%arg0: i32) -> (i32, i32) {
    %c0_i32 = arith.constant 0 : i32
    %c0_i32_0 = arith.constant 0 : i32
    return %arg0, %c0_i32 : i32, i32
  }
  func.func @transform_2(%arg0: i32) -> (i32, i32, i32, i32) {
    %c0_i32 = arith.constant 0 : i32
    %c0_i32_0 = arith.constant 0 : i32
    %c0_i32_1 = arith.constant 0 : i32
    %c0_i32_2 = arith.constant 0 : i32
    return %arg0, %c0_i32, %c0_i32_0, %c0_i32_1 : i32, i32, i32, i32
  }
}

</mosaic_0001>

<llo_original>
// kernel: tpu_custom_call.1
$region0: #{tpu_custom_call.1}
  #allocation0 [shape = 'u32[]', space=smem, size = 0x4, offset = 0x4, fixed_abs, tag = 'smem constant byte address 0x4 - core index']
  #allocation1 [shape = 'u32[144,128]{1,0:T(1,128)}', space=vmem, size = 0x12000, scoped, tag = 'internal scratch']
  %s0 = inlined_call_operand.vmem [shape: f32[256,64], index: 0, kind: input, shape index: {}]
  %s1 = inlined_call_operand.vmem [shape: f32[16,256], index: 1, kind: input, shape index: {}]
  %s2 = inlined_call_operand.hbm [shape: f32[2,2,8,64], index: 2, kind: output, shape index: {}]
  %s3 = sld [smem:[#allocation0]]
  $region41: #{tpu_custom_call.1} parent=0
    _
  %s5 = ssub.s32 1, %s3
  %s6 = scalar_select 0, %s5, %s3
  $region1: #{tpu_custom_call.1} parent=0
    #allocation2 [shape = 'u8[16384]{0}', space=vmem, size = 0x4000, scoped, tag = 'output window, operand 0']
    #allocation3 [shape = 's32[2]{0}', space=sflag, size = 0x8, scoped, tag = 'scoped memory for tpu_custom_call.1']
    %7 = vsyncpa [#allocation3], 0
    %s8 = scalar_lea.sflag [#allocation3], 1
    %9 = vsyncpa %s8, 0
    loop: start=0, step=1, limit=4
    $region2: #{tpu_custom_call.1} parent=1 // loop_pre_header
      _
    $region3: #{tpu_custom_call.1} parent=1 // loop_header
      %s11 = sphi 0, %s15
      %p12 = scmp.ge.s32.totalorder %s11, 4
      %s19 = sphi 0, %s19
      %s21 = sphi 0, %s19
      %s22 = sphi 0, %s21
      %s36 = sphi 0, %s22
      %s42 = sphi 0, %s44
      %s45 = sphi 0, %s42
      %s46 = sphi 0, %s45
      %s62 = sphi 0, %s46
      %s68 = sphi 0, %s70
      %s71 = sphi 0, %s68
      %s72 = sphi 0, %s71
      %s88 = sphi 0, %s72
    $region4: #{tpu_custom_call.1} parent=1 // loop_header_branch
      %14 = sbr.rel (%p12) target = $region8
    $region5: #{tpu_custom_call.1} parent=1 // loop_body
      %s16 = ssub.s32 %s11, 1
      %s17 = ssub.s32 %s11, 2
      %s18 = sadd.s32 %s11, 1
      %s20 = sadd.s32 %s19, 1
      %p23 = scmp.eq.s32.totalorder %s11, 1
      %p24 = scmp.ne.s32.totalorder %s19, %s21
      %p25 = scmp.eq.s32.totalorder %s11, 0
      %p26 = por %p24, %p25
      %p27 = scmp.ne.s32.totalorder %s19, %s21
      %p28 = scmp.eq.s32.totalorder %s16, 1
      %p29 = por %p27, %p28
      %p30 = scmp.ne.s32.totalorder %s21, %s22
      %p31 = scmp.eq.s32.totalorder %s16, 0
      %p32 = por %p30, %p31
      %p33 = scmp.ne.s32.totalorder %s21, %s22
      %p34 = scmp.eq.s32.totalorder %s17, 1
      %p35 = por %p33, %p34
      %p37 = scmp.ne.s32.totalorder %s22, %s36
      %p38 = scmp.eq.s32.totalorder %s17, 0
      %p39 = por %p37, %p38
      %s40 = ssub.s32 %s11, %s18
      %p41 = scmp.eq.s32.totalorder %s40, 0
      %s43 = sadd.s32 %s42, 1
      %s44 = scalar_select %p41, %s42, %s43
      %p47 = pneg %p41
      %p48 = scmp.eq.s32.totalorder %s11, 1
      %p49 = por %p47, %p48
      %p50 = scmp.ne.s32.totalorder %s42, %s45
      %p51 = scmp.eq.s32.totalorder %s11, 0
      %p52 = por %p50, %p51
      %p53 = scmp.ne.s32.totalorder %s42, %s45
      %p54 = scmp.eq.s32.totalorder %s16, 1
      %p55 = por %p53, %p54
      %p56 = scmp.ne.s32.totalorder %s45, %s46
      %p57 = scmp.eq.s32.totalorder %s16, 0
      %p58 = por %p56, %p57
      %p59 = scmp.ne.s32.totalorder %s45, %s46
      %p60 = scmp.eq.s32.totalorder %s17, 1
      %p61 = por %p59, %p60
      %p63 = scmp.ne.s32.totalorder %s46, %s62
      %p64 = scmp.eq.s32.totalorder %s17, 0
      %p65 = por %p63, %p64
      %s66 = ssub.s32 %s11, %s18
      %p67 = scmp.eq.s32.totalorder %s66, 0
      %s69 = sadd.s32 %s68, 1
      %s70 = scalar_select %p67, %s68, %s69
      %p73 = pneg %p67
      %p74 = scmp.eq.s32.totalorder %s11, 1
      %p75 = por %p73, %p74
      %p76 = scmp.ne.s32.totalorder %s68, %s71
      %p77 = scmp.eq.s32.totalorder %s11, 0
      %p78 = por %p76, %p77
      %p79 = scmp.ne.s32.totalorder %s68, %s71
      %p80 = scmp.eq.s32.totalorder %s16, 1
      %p81 = por %p79, %p80
      %p82 = scmp.ne.s32.totalorder %s71, %s72
      %p83 = scmp.eq.s32.totalorder %s16, 0
      %p84 = por %p82, %p83
      %p85 = scmp.ne.s32.totalorder %s71, %s72
      %p86 = scmp.eq.s32.totalorder %s17, 1
      %p87 = por %p85, %p86
      %p89 = scmp.ne.s32.totalorder %s72, %s88
      %p90 = scmp.eq.s32.totalorder %s17, 0
      %p91 = por %p89, %p90
      %p92 = scmp.le.s32.totalorder 1, %s11
      %p93 = scmp.lt.s32.totalorder %s11, 3
      %p94 = pnand %p92, %p93
      %p95 = pneg %p94
      // Predicated region
      $region9: #{tpu_custom_call.1} parent=5 // pred_check
        _
      $region10: #{tpu_custom_call.1} parent=5 // pred_check_branch
        %97 = sbr.rel (%p94) target = $region12
      $region11: #{tpu_custom_call.1} parent=5 // pred_region
        %s98 = ssub.s32 %s11, 1
        // Predicated region
        $region13: #{tpu_custom_call.1} parent=11 // pred_check
          %p99 = pneg %p32
        $region14: #{tpu_custom_call.1} parent=11 // pred_check_branch
          %101 = sbr.rel (%p99) target = $region16
        $region15: #{tpu_custom_call.1} parent=11 // pred_region
          _
        $region16: #{tpu_custom_call.1} parent=11 // pred_fallthru
          _
      $region12: #{tpu_custom_call.1} parent=5 // pred_fallthru
        _
      %p102 = scmp.lt.s32.totalorder %s11, 2
      // Predicated region
      $region17: #{tpu_custom_call.1} parent=5 // pred_check
        %p103 = pneg %p102
      $region18: #{tpu_custom_call.1} parent=5 // pred_check_branch
        %105 = sbr.rel (%p103) target = $region20
      $region19: #{tpu_custom_call.1} parent=5 // pred_region
        // Predicated region
        $region21: #{tpu_custom_call.1} parent=19 // pred_check
          %p106 = pneg %p52
        $region22: #{tpu_custom_call.1} parent=19 // pred_check_branch
          %108 = sbr.rel (%p106) target = $region24
        $region23: #{tpu_custom_call.1} parent=19 // pred_region
          %p109 = scmp.lt.s32.totalorder %s11, 1
          %s110 = scalar_select %p109, %s11, 1
          %s111 = smul.addr %s110, 2
          %s112 = smul.addr %s111, 8
          %s113 = scalar_lea.vmem %s1, %s112
        $region24: #{tpu_custom_call.1} parent=19 // pred_fallthru
          _
      $region20: #{tpu_custom_call.1} parent=5 // pred_fallthru
        _
      %p114 = scmp.le.s32.totalorder 1, %s11
      %p115 = scmp.lt.s32.totalorder %s11, 3
      %p116 = pnand %p114, %p115
      %p117 = pneg %p116
      // Predicated region
      $region25: #{tpu_custom_call.1} parent=5 // pred_check
        _
      $region26: #{tpu_custom_call.1} parent=5 // pred_check_branch
        %119 = sbr.rel (%p116) target = $region28
      $region27: #{tpu_custom_call.1} parent=5 // pred_region
        %s120 = ssub.s32 %s11, 1
        %p121 = pneg %p32
        %p122 = pneg %p29
        %p123 = scmp.lt.s32.totalorder %s16, 1
        %s124 = scalar_select %p123, %s16, 1
        %s125 = smul.addr %s124, 2
        %s126 = smul.addr %s125, 8
        %s127 = scalar_lea.vmem %s1, %s126
        %p128 = pneg %p58
        %p129 = pneg %p55
        %p130 = pneg %p84
        %p131 = pneg %p81
        %s132 = sand.u32 %s71, 1
        %s133 = scalar_lea.sflag [#allocation3], %s132
        %s134 = sand.u32 %s71, 1
        %s135 = smul.addr %s134, 16
        %s136 = scalar_lea.vmem [#allocation2], %s135
        %p137 = scmp.lt.s32.totalorder %s16, 1
        %s138 = scalar_select %p137, %s16, 1
        %s139 = smul.addr %s138, 2
        %s140 = smul.addr %s139, 8
        %s141 = scalar_lea.vmem %s1, %s140
        %v142 = vld [vmem:[%s141] sm:$0xff]
        %v143 = vld [vmem:[%s141 + $0x8] sm:$0xff]
        %v144 = vld [vmem:[%s0] sm:$0xff]
        %v145 = vld [vmem:[%s0 + $0x8] sm:$0xff]
        %v146 = vld [vmem:[%s0 + $0x10] sm:$0xff]
        %v147 = vld [vmem:[%s0 + $0x18] sm:$0xff]
        %v148 = vld [vmem:[%s0 + $0x20] sm:$0xff]
        %v149 = vld [vmem:[%s0 + $0x28] sm:$0xff]
        %v150 = vld [vmem:[%s0 + $0x30] sm:$0xff]
        %v151 = vld [vmem:[%s0 + $0x38] sm:$0xff]
        %v152 = vld [vmem:[%s0 + $0x40] sm:$0xff]
        %v153 = vld [vmem:[%s0 + $0x48] sm:$0xff]
        %v154 = vld [vmem:[%s0 + $0x50] sm:$0xff]
        %v155 = vld [vmem:[%s0 + $0x58] sm:$0xff]
        %v156 = vld [vmem:[%s0 + $0x60] sm:$0xff]
        %v157 = vld [vmem:[%s0 + $0x68] sm:$0xff]
        %v158 = vld [vmem:[%s0 + $0x70] sm:$0xff]
        %v159 = vld [vmem:[%s0 + $0x78] sm:$0xff]
        %v160 = vld [vmem:[%s0 + $0x80] sm:$0xff]
        %v161 = vld [vmem:[%s0 + $0x88] sm:$0xff]
        %v162 = vld [vmem:[%s0 + $0x90] sm:$0xff]
        %v163 = vld [vmem:[%s0 + $0x98] sm:$0xff]
        %v164 = vld [vmem:[%s0 + $0xa0] sm:$0xff]
        %v165 = vld [vmem:[%s0 + $0xa8] sm:$0xff]
        %v166 = vld [vmem:[%s0 + $0xb0] sm:$0xff]
        %v167 = vld [vmem:[%s0 + $0xb8] sm:$0xff]
        %v168 = vld [vmem:[%s0 + $0xc0] sm:$0xff]
        %v169 = vld [vmem:[%s0 + $0xc8] sm:$0xff]
        %v170 = vld [vmem:[%s0 + $0xd0] sm:$0xff]
        %v171 = vld [vmem:[%s0 + $0xd8] sm:$0xff]
        %v172 = vld [vmem:[%s0 + $0xe0] sm:$0xff]
        %v173 = vld [vmem:[%s0 + $0xe8] sm:$0xff]
        %v174 = vld [vmem:[%s0 + $0xf0] sm:$0xff]
        %v175 = vld [vmem:[%s0 + $0xf8] sm:$0xff]
        %176 = vmatprep.subr.mxu0 0.0
        %v177 = vand.u32 %v144, 4294901760
        %178 = vmatpush1.msra.mxu0 %v177
        %179 = vmatprep.subr.mxu0 0.0
        %v180 = vand.u32 %v145, 4294901760
        %181 = vmatpush1.msra.mxu0 %v180
        %182 = vmatprep.subr.mxu0 0.0
        %v183 = vand.u32 %v146, 4294901760
        %184 = vmatpush1.msra.mxu0 %v183
        %185 = vmatprep.subr.mxu0 0.0
        %v186 = vand.u32 %v147, 4294901760
        %187 = vmatpush1.msra.mxu0 %v186
        %188 = vmatprep.subr.mxu0 0.0
        %v189 = vand.u32 %v148, 4294901760
        %190 = vmatpush1.msra.mxu0 %v189
        %191 = vmatprep.subr.mxu0 0.0
        %v192 = vand.u32 %v149, 4294901760
        %193 = vmatpush1.msra.mxu0 %v192
        %194 = vmatprep.subr.mxu0 0.0
        %v195 = vand.u32 %v150, 4294901760
        %196 = vmatpush1.msra.mxu0 %v195
        %197 = vmatprep.subr.mxu0 0.0
        %v198 = vand.u32 %v151, 4294901760
        %199 = vmatpush1.msra.mxu0 %v198
        %200 = vmatprep.subr.mxu0 0.0
        %v201 = vand.u32 %v152, 4294901760
        %202 = vmatpush1.msra.mxu0 %v201
        %203 = vmatprep.subr.mxu0 0.0
        %v204 = vand.u32 %v153, 4294901760
        %205 = vmatpush1.msra.mxu0 %v204
        %206 = vmatprep.subr.mxu0 0.0
        %v207 = vand.u32 %v154, 4294901760
        %208 = vmatpush1.msra.mxu0 %v207
        %209 = vmatprep.subr.mxu0 0.0
        %v210 = vand.u32 %v155, 4294901760
        %211 = vmatpush1.msra.mxu0 %v210
        %212 = vmatprep.subr.mxu0 0.0
        %v213 = vand.u32 %v156, 4294901760
        %214 = vmatpush1.msra.mxu0 %v213
        %215 = vmatprep.subr.mxu0 0.0
        %v216 = vand.u32 %v157, 4294901760
        %217 = vmatpush1.msra.mxu0 %v216
        %218 = vmatprep.subr.mxu0 0.0
        %v219 = vand.u32 %v158, 4294901760
        %220 = vmatpush1.msra.mxu0 %v219
        %221 = vmatprep.subr.mxu0 0.0
        %v222 = vand.u32 %v159, 4294901760
        %223 = vmatpush1.msra.mxu0 %v222
        %224 = vmatprep.subr.mxu0 0.0
        %v225 = vand.u32 %v160, 4294901760
        %226 = vmatpush1.msra.mxu0 %v225
        %227 = vmatprep.subr.mxu0 0.0
        %v228 = vand.u32 %v161, 4294901760
        %229 = vmatpush1.msra.mxu0 %v228
        %230 = vmatprep.subr.mxu0 0.0
        %v231 = vand.u32 %v162, 4294901760
        %232 = vmatpush1.msra.mxu0 %v231
        %233 = vmatprep.subr.mxu0 0.0
        %v234 = vand.u32 %v163, 4294901760
        %235 = vmatpush1.msra.mxu0 %v234
        %236 = vmatprep.subr.mxu0 0.0
        %v237 = vand.u32 %v164, 4294901760
        %238 = vmatpush1.msra.mxu0 %v237
        %239 = vmatprep.subr.mxu0 0.0
        %v240 = vand.u32 %v165, 4294901760
        %241 = vmatpush1.msra.mxu0 %v240
        %242 = vmatprep.subr.mxu0 0.0
        %v243 = vand.u32 %v166, 4294901760
        %244 = vmatpush1.msra.mxu0 %v243
        %245 = vmatprep.subr.mxu0 0.0
        %v246 = vand.u32 %v167, 4294901760
        %247 = vmatpush1.msra.mxu0 %v246
        %248 = vmatprep.subr.mxu0 0.0
        %v249 = vand.u32 %v168, 4294901760
        %250 = vmatpush1.msra.mxu0 %v249
        %251 = vmatprep.subr.mxu0 0.0
        %v252 = vand.u32 %v169, 4294901760
        %253 = vmatpush1.msra.mxu0 %v252
        %254 = vmatprep.subr.mxu0 0.0
        %v255 = vand.u32 %v170, 4294901760
        %256 = vmatpush1.msra.mxu0 %v255
        %257 = vmatprep.subr.mxu0 0.0
        %v258 = vand.u32 %v171, 4294901760
        %259 = vmatpush1.msra.mxu0 %v258
        %260 = vmatprep.subr.mxu0 0.0
        %v261 = vand.u32 %v172, 4294901760
        %262 = vmatpush1.msra.mxu0 %v261
        %263 = vmatprep.subr.mxu0 0.0
        %v264 = vand.u32 %v173, 4294901760
        %265 = vmatpush1.msra.mxu0 %v264
        %266 = vmatprep.subr.mxu0 0.0
        %v267 = vand.u32 %v174, 4294901760
        %268 = vmatpush1.msra.mxu0 %v267
        %269 = vmatprep.subr.mxu0 0.0
        %v270 = vand.u32 %v175, 4294901760
        %271 = vmatpush1.msra.mxu0 %v270
        %v272 = vand.u32 %v143, 4294901760
        %v273 = vsub.f32 %v143, %v272
        %v274 = vand.u32 %v273, 4294901760
        %v275 = vsub.f32 %v273, %v274
        %v276 = vand.u32 %v275, 4294901760
        %277 = vmatprep.mubr.f32.mxu0 %v276
        %v278 = vand.u32 %v142, 4294901760
        %v279 = vsub.f32 %v142, %v278
        %v280 = vand.u32 %v279, 4294901760
        %v281 = vsub.f32 %v279, %v280
        %v282 = vand.u32 %v281, 4294901760
        %283 = vmatmul.mubr.f32.gmra.mrb[0].mxu0 %v282
        %v284 = vpop.f32.mrb[0].mxu0
        %v285 = vadd.f32 0.0, %v284
        %v286 = vpop.f32.mrb[0].mxu0
        %287 = vdwg.mxu0
        %288 = vmatprep.subr.mxu0 0.0
        %v289 = vand.u32 %v144, 4294901760
        %v290 = vsub.f32 %v144, %v289
        %v291 = vand.u32 %v290, 4294901760
        %v292 = vsub.f32 %v290, %v291
        %v293 = vand.u32 %v292, 4294901760
        %294 = vmatpush1.msra.mxu0 %v293
        %295 = vmatprep.subr.mxu0 0.0
        %v296 = vand.u32 %v145, 4294901760
        %v297 = vsub.f32 %v145, %v296
        %v298 = vand.u32 %v297, 4294901760
        %v299 = vsub.f32 %v297, %v298
        %v300 = vand.u32 %v299, 4294901760
        %301 = vmatpush1.msra.mxu0 %v300
        %302 = vmatprep.subr.mxu0 0.0
        %v303 = vand.u32 %v146, 4294901760
        %v304 = vsub.f32 %v146, %v303
        %v305 = vand.u32 %v304, 4294901760
        %v306 = vsub.f32 %v304, %v305
        %v307 = vand.u32 %v306, 4294901760
        %308 = vmatpush1.msra.mxu0 %v307
        %309 = vmatprep.subr.mxu0 0.0
        %v310 = vand.u32 %v147, 4294901760
        %v311 = vsub.f32 %v147, %v310
        %v312 = vand.u32 %v311, 4294901760
        %v313 = vsub.f32 %v311, %v312
        %v314 = vand.u32 %v313, 4294901760
        %315 = vmatpush1.msra.mxu0 %v314
        %316 = vmatprep.subr.mxu0 0.0
        %v317 = vand.u32 %v148, 4294901760
        %v318 = vsub.f32 %v148, %v317
        %v319 = vand.u32 %v318, 4294901760
        %v320 = vsub.f32 %v318, %v319
        %v321 = vand.u32 %v320, 4294901760
        %322 = vmatpush1.msra.mxu0 %v321
        %323 = vmatprep.subr.mxu0 0.0
        %v324 = vand.u32 %v149, 4294901760
        %v325 = vsub.f32 %v149, %v324
        %v326 = vand.u32 %v325, 4294901760
        %v327 = vsub.f32 %v325, %v326
        %v328 = vand.u32 %v327, 4294901760
        %329 = vmatpush1.msra.mxu0 %v328
        %330 = vmatprep.subr.mxu0 0.0
        %v331 = vand.u32 %v150, 4294901760
        %v332 = vsub.f32 %v150, %v331
        %v333 = vand.u32 %v332, 4294901760
        %v334 = vsub.f32 %v332, %v333
        %v335 = vand.u32 %v334, 4294901760
        %336 = vmatpush1.msra.mxu0 %v335
        %337 = vmatprep.subr.mxu0 0.0
        %v338 = vand.u32 %v151, 4294901760
        %v339 = vsub.f32 %v151, %v338
        %v340 = vand.u32 %v339, 4294901760
        %v341 = vsub.f32 %v339, %v340
        %v342 = vand.u32 %v341, 4294901760
        %343 = vmatpush1.msra.mxu0 %v342
        %344 = vmatprep.subr.mxu0 0.0
        %v345 = vand.u32 %v152, 4294901760
        %v346 = vsub.f32 %v152, %v345
        %v347 = vand.u32 %v346, 4294901760
        %v348 = vsub.f32 %v346, %v347
        %v349 = vand.u32 %v348, 4294901760
        %350 = vmatpush1.msra.mxu0 %v349
        %351 = vmatprep.subr.mxu0 0.0
        %v352 = vand.u32 %v153, 4294901760
        %v353 = vsub.f32 %v153, %v352
        %v354 = vand.u32 %v353, 4294901760
        %v355 = vsub.f32 %v353, %v354
        %v356 = vand.u32 %v355, 4294901760
        %357 = vmatpush1.msra.mxu0 %v356
        %358 = vmatprep.subr.mxu0 0.0
        %v359 = vand.u32 %v154, 4294901760
        %v360 = vsub.f32 %v154, %v359
        %v361 = vand.u32 %v360, 4294901760
        %v362 = vsub.f32 %v360, %v361
        %v363 = vand.u32 %v362, 4294901760
        %364 = vmatpush1.msra.mxu0 %v363
        %365 = vmatprep.subr.mxu0 0.0
        %v366 = vand.u32 %v155, 4294901760
        %v367 = vsub.f32 %v155, %v366
        %v368 = vand.u32 %v367, 4294901760
        %v369 = vsub.f32 %v367, %v368
        %v370 = vand.u32 %v369, 4294901760
        %371 = vmatpush1.msra.mxu0 %v370
        %372 = vmatprep.subr.mxu0 0.0
        %v373 = vand.u32 %v156, 4294901760
        %v374 = vsub.f32 %v156, %v373
        %v375 = vand.u32 %v374, 4294901760
        %v376 = vsub.f32 %v374, %v375
        %v377 = vand.u32 %v376, 4294901760
        %378 = vmatpush1.msra.mxu0 %v377
        %379 = vmatprep.subr.mxu0 0.0
        %v380 = vand.u32 %v157, 4294901760
        %v381 = vsub.f32 %v157, %v380
        %v382 = vand.u32 %v381, 4294901760
        %v383 = vsub.f32 %v381, %v382
        %v384 = vand.u32 %v383, 4294901760
        %385 = vmatpush1.msra.mxu0 %v384
        %386 = vmatprep.subr.mxu0 0.0
        %v387 = vand.u32 %v158, 4294901760
        %v388 = vsub.f32 %v158, %v387
        %v389 = vand.u32 %v388, 4294901760
        %v390 = vsub.f32 %v388, %v389
        %v391 = vand.u32 %v390, 4294901760
        %392 = vmatpush1.msra.mxu0 %v391
        %393 = vmatprep.subr.mxu0 0.0
        %v394 = vand.u32 %v159, 4294901760
        %v395 = vsub.f32 %v159, %v394
        %v396 = vand.u32 %v395, 4294901760
        %v397 = vsub.f32 %v395, %v396
        %v398 = vand.u32 %v397, 4294901760
        %399 = vmatpush1.msra.mxu0 %v398
        %400 = vmatprep.subr.mxu0 0.0
        %v401 = vand.u32 %v160, 4294901760
        %v402 = vsub.f32 %v160, %v401
        %v403 = vand.u32 %v402, 4294901760
        %v404 = vsub.f32 %v402, %v403
        %v405 = vand.u32 %v404, 4294901760
        %406 = vmatpush1.msra.mxu0 %v405
        %407 = vmatprep.subr.mxu0 0.0
        %v408 = vand.u32 %v161, 4294901760
        %v409 = vsub.f32 %v161, %v408
        %v410 = vand.u32 %v409, 4294901760
        %v411 = vsub.f32 %v409, %v410
        %v412 = vand.u32 %v411, 4294901760
        %413 = vmatpush1.msra.mxu0 %v412
        %414 = vmatprep.subr.mxu0 0.0
        %v415 = vand.u32 %v162, 4294901760
        %v416 = vsub.f32 %v162, %v415
        %v417 = vand.u32 %v416, 4294901760
        %v418 = vsub.f32 %v416, %v417
        %v419 = vand.u32 %v418, 4294901760
        %420 = vmatpush1.msra.mxu0 %v419
        %421 = vmatprep.subr.mxu0 0.0
        %v422 = vand.u32 %v163, 4294901760
        %v423 = vsub.f32 %v163, %v422
        %v424 = vand.u32 %v423, 4294901760
        %v425 = vsub.f32 %v423, %v424
        %v426 = vand.u32 %v425, 4294901760
        %427 = vmatpush1.msra.mxu0 %v426
        %428 = vmatprep.subr.mxu0 0.0
        %v429 = vand.u32 %v164, 4294901760
        %v430 = vsub.f32 %v164, %v429
        %v431 = vand.u32 %v430, 4294901760
        %v432 = vsub.f32 %v430, %v431
        %v433 = vand.u32 %v432, 4294901760
        %434 = vmatpush1.msra.mxu0 %v433
        %435 = vmatprep.subr.mxu0 0.0
        %v436 = vand.u32 %v165, 4294901760
        %v437 = vsub.f32 %v165, %v436
        %v438 = vand.u32 %v437, 4294901760
        %v439 = vsub.f32 %v437, %v438
        %v440 = vand.u32 %v439, 4294901760
        %441 = vmatpush1.msra.mxu0 %v440
        %442 = vmatprep.subr.mxu0 0.0
        %v443 = vand.u32 %v166, 4294901760
        %v444 = vsub.f32 %v166, %v443
        %v445 = vand.u32 %v444, 4294901760
        %v446 = vsub.f32 %v444, %v445
        %v447 = vand.u32 %v446, 4294901760
        %448 = vmatpush1.msra.mxu0 %v447
        %449 = vmatprep.subr.mxu0 0.0
        %v450 = vand.u32 %v167, 4294901760
        %v451 = vsub.f32 %v167, %v450
        %v452 = vand.u32 %v451, 4294901760
        %v453 = vsub.f32 %v451, %v452
        %v454 = vand.u32 %v453, 4294901760
        %455 = vmatpush1.msra.mxu0 %v454
        %456 = vmatprep.subr.mxu0 0.0
        %v457 = vand.u32 %v168, 4294901760
        %v458 = vsub.f32 %v168, %v457
        %v459 = vand.u32 %v458, 4294901760
        %v460 = vsub.f32 %v458, %v459
        %v461 = vand.u32 %v460, 4294901760
        %462 = vmatpush1.msra.mxu0 %v461
        %463 = vmatprep.subr.mxu0 0.0
        %v464 = vand.u32 %v169, 4294901760
        %v465 = vsub.f32 %v169, %v464
        %v466 = vand.u32 %v465, 4294901760
        %v467 = vsub.f32 %v465, %v466
        %v468 = vand.u32 %v467, 4294901760
        %469 = vmatpush1.msra.mxu0 %v468
        %470 = vmatprep.subr.mxu0 0.0
        %v471 = vand.u32 %v170, 4294901760
        %v472 = vsub.f32 %v170, %v471
        %v473 = vand.u32 %v472, 4294901760
        %v474 = vsub.f32 %v472, %v473
        %v475 = vand.u32 %v474, 4294901760
        %476 = vmatpush1.msra.mxu0 %v475
        %477 = vmatprep.subr.mxu0 0.0
        %v478 = vand.u32 %v171, 4294901760
        %v479 = vsub.f32 %v171, %v478
        %v480 = vand.u32 %v479, 4294901760
        %v481 = vsub.f32 %v479, %v480
        %v482 = vand.u32 %v481, 4294901760
        %483 = vmatpush1.msra.mxu0 %v482
        %484 = vmatprep.subr.mxu0 0.0
        %v485 = vand.u32 %v172, 4294901760
        %v486 = vsub.f32 %v172, %v485
        %v487 = vand.u32 %v486, 4294901760
        %v488 = vsub.f32 %v486, %v487
        %v489 = vand.u32 %v488, 4294901760
        %490 = vmatpush1.msra.mxu0 %v489
        %491 = vmatprep.subr.mxu0 0.0
        %v492 = vand.u32 %v173, 4294901760
        %v493 = vsub.f32 %v173, %v492
        %v494 = vand.u32 %v493, 4294901760
        %v495 = vsub.f32 %v493, %v494
        %v496 = vand.u32 %v495, 4294901760
        %497 = vmatpush1.msra.mxu0 %v496
        %498 = vmatprep.subr.mxu0 0.0
        %v499 = vand.u32 %v174, 4294901760
        %v500 = vsub.f32 %v174, %v499
        %v501 = vand.u32 %v500, 4294901760
        %v502 = vsub.f32 %v500, %v501
        %v503 = vand.u32 %v502, 4294901760
        %504 = vmatpush1.msra.mxu0 %v503
        %505 = vmatprep.subr.mxu0 0.0
        %v506 = vand.u32 %v175, 4294901760
        %v507 = vsub.f32 %v175, %v506
        %v508 = vand.u32 %v507, 4294901760
        %v509 = vsub.f32 %v507, %v508
        %v510 = vand.u32 %v509, 4294901760
        %511 = vmatpush1.msra.mxu0 %v510
        %v512 = vand.u32 %v143, 4294901760
        %513 = vmatprep.mubr.f32.mxu0 %v512
        %v514 = vand.u32 %v142, 4294901760
        %515 = vmatmul.mubr.f32.gmra.mrb[0].mxu0 %v514
        %v516 = vpop.f32.mrb[0].mxu0
        %v517 = vadd.f32 %v285, %v516
        %v518 = vpop.f32.mrb[0].mxu0
        %519 = vdwg.mxu0
        %520 = vmatprep.subr.mxu0 0.0
        %v521 = vand.u32 %v144, 4294901760
        %v522 = vsub.f32 %v144, %v521
        %523 = vmatpush1.msra.mxu0 %v522
        %524 = vmatprep.subr.mxu0 0.0
        %v525 = vand.u32 %v145, 4294901760
        %v526 = vsub.f32 %v145, %v525
        %527 = vmatpush1.msra.mxu0 %v526
        %528 = vmatprep.subr.mxu0 0.0
        %v529 = vand.u32 %v146, 4294901760
        %v530 = vsub.f32 %v146, %v529
        %531 = vmatpush1.msra.mxu0 %v530
        %532 = vmatprep.subr.mxu0 0.0
        %v533 = vand.u32 %v147, 4294901760
        %v534 = vsub.f32 %v147, %v533
        %535 = vmatpush1.msra.mxu0 %v534
        %536 = vmatprep.subr.mxu0 0.0
        %v537 = vand.u32 %v148, 4294901760
        %v538 = vsub.f32 %v148, %v537
        %539 = vmatpush1.msra.mxu0 %v538
        %540 = vmatprep.subr.mxu0 0.0
        %v541 = vand.u32 %v149, 4294901760
        %v542 = vsub.f32 %v149, %v541
        %543 = vmatpush1.msra.mxu0 %v542
        %544 = vmatprep.subr.mxu0 0.0
        %v545 = vand.u32 %v150, 4294901760
        %v546 = vsub.f32 %v150, %v545
        %547 = vmatpush1.msra.mxu0 %v546
        %548 = vmatprep.subr.mxu0 0.0
        %v549 = vand.u32 %v151, 4294901760
        %v550 = vsub.f32 %v151, %v549
        %551 = vmatpush1.msra.mxu0 %v550
        %552 = vmatprep.subr.mxu0 0.0
        %v553 = vand.u32 %v152, 4294901760
        %v554 = vsub.f32 %v152, %v553
        %555 = vmatpush1.msra.mxu0 %v554
        %556 = vmatprep.subr.mxu0 0.0
        %v557 = vand.u32 %v153, 4294901760
        %v558 = vsub.f32 %v153, %v557
        %559 = vmatpush1.msra.mxu0 %v558
        %560 = vmatprep.subr.mxu0 0.0
        %v561 = vand.u32 %v154, 4294901760
        %v562 = vsub.f32 %v154, %v561
        %563 = vmatpush1.msra.mxu0 %v562
        %564 = vmatprep.subr.mxu0 0.0
        %v565 = vand.u32 %v155, 4294901760
        %v566 = vsub.f32 %v155, %v565
        %567 = vmatpush1.msra.mxu0 %v566
        %568 = vmatprep.subr.mxu0 0.0
        %v569 = vand.u32 %v156, 4294901760
        %v570 = vsub.f32 %v156, %v569
        %571 = vmatpush1.msra.mxu0 %v570
        %572 = vmatprep.subr.mxu0 0.0
        %v573 = vand.u32 %v157, 4294901760
        %v574 = vsub.f32 %v157, %v573
        %575 = vmatpush1.msra.mxu0 %v574
        %576 = vmatprep.subr.mxu0 0.0
        %v577 = vand.u32 %v158, 4294901760
        %v578 = vsub.f32 %v158, %v577
        %579 = vmatpush1.msra.mxu0 %v578
        %580 = vmatprep.subr.mxu0 0.0
        %v581 = vand.u32 %v159, 4294901760
        %v582 = vsub.f32 %v159, %v581
        %583 = vmatpush1.msra.mxu0 %v582
        %584 = vmatprep.subr.mxu0 0.0
        %v585 = vand.u32 %v160, 4294901760
        %v586 = vsub.f32 %v160, %v585
        %587 = vmatpush1.msra.mxu0 %v586
        %588 = vmatprep.subr.mxu0 0.0
        %v589 = vand.u32 %v161, 4294901760
        %v590 = vsub.f32 %v161, %v589
        %591 = vmatpush1.msra.mxu0 %v590
        %592 = vmatprep.subr.mxu0 0.0
        %v593 = vand.u32 %v162, 4294901760
        %v594 = vsub.f32 %v162, %v593
        %595 = vmatpush1.msra.mxu0 %v594
        %596 = vmatprep.subr.mxu0 0.0
        %v597 = vand.u32 %v163, 4294901760
        %v598 = vsub.f32 %v163, %v597
        %599 = vmatpush1.msra.mxu0 %v598
        %600 = vmatprep.subr.mxu0 0.0
        %v601 = vand.u32 %v164, 4294901760
        %v602 = vsub.f32 %v164, %v601
        %603 = vmatpush1.msra.mxu0 %v602
        %604 = vmatprep.subr.mxu0 0.0
        %v605 = vand.u32 %v165, 4294901760
        %v606 = vsub.f32 %v165, %v605
        %607 = vmatpush1.msra.mxu0 %v606
        %608 = vmatprep.subr.mxu0 0.0
        %v609 = vand.u32 %v166, 4294901760
        %v610 = vsub.f32 %v166, %v609
        %611 = vmatpush1.msra.mxu0 %v610
        %612 = vmatprep.subr.mxu0 0.0
        %v613 = vand.u32 %v167, 4294901760
        %v614 = vsub.f32 %v167, %v613
        %615 = vmatpush1.msra.mxu0 %v614
        %616 = vmatprep.subr.mxu0 0.0
        %v617 = vand.u32 %v168, 4294901760
        %v618 = vsub.f32 %v168, %v617
        %619 = vmatpush1.msra.mxu0 %v618
        %620 = vmatprep.subr.mxu0 0.0
        %v621 = vand.u32 %v169, 4294901760
        %v622 = vsub.f32 %v169, %v621
        %623 = vmatpush1.msra.mxu0 %v622
        %624 = vmatprep.subr.mxu0 0.0
        %v625 = vand.u32 %v170, 4294901760
        %v626 = vsub.f32 %v170, %v625
        %627 = vmatpush1.msra.mxu0 %v626
        %628 = vmatprep.subr.mxu0 0.0
        %v629 = vand.u32 %v171, 4294901760
        %v630 = vsub.f32 %v171, %v629
        %631 = vmatpush1.msra.mxu0 %v630
        %632 = vmatprep.subr.mxu0 0.0
        %v633 = vand.u32 %v172, 4294901760
        %v634 = vsub.f32 %v172, %v633
        %635 = vmatpush1.msra.mxu0 %v634
        %636 = vmatprep.subr.mxu0 0.0
        %v637 = vand.u32 %v173, 4294901760
        %v638 = vsub.f32 %v173, %v637
        %639 = vmatpush1.msra.mxu0 %v638
        %640 = vmatprep.subr.mxu0 0.0
        %v641 = vand.u32 %v174, 4294901760
        %v642 = vsub.f32 %v174, %v641
        %643 = vmatpush1.msra.mxu0 %v642
        %644 = vmatprep.subr.mxu0 0.0
        %v645 = vand.u32 %v175, 4294901760
        %v646 = vsub.f32 %v175, %v645
        %647 = vmatpush1.msra.mxu0 %v646
        %v648 = vand.u32 %v143, 4294901760
        %v649 = vsub.f32 %v143, %v648
        %650 = vmatprep.mubr.f32.mxu0 %v649
        %v651 = vand.u32 %v142, 4294901760
        %v652 = vsub.f32 %v142, %v651
        %653 = vmatmul.mubr.f32.gmra.mrb[0].mxu0 %v652
        %v654 = vpop.f32.mrb[0].mxu0
        %v655 = vadd.f32 %v517, %v654
        %v656 = vpop.f32.mrb[0].mxu0
        %657 = vdwg.mxu0
        %658 = vmatprep.subr.mxu0 0.0
        %v659 = vand.u32 %v144, 4294901760
        %660 = vmatpush1.msra.mxu0 %v659
        %661 = vmatprep.subr.mxu0 0.0
        %v662 = vand.u32 %v145, 4294901760
        %663 = vmatpush1.msra.mxu0 %v662
        %664 = vmatprep.subr.mxu0 0.0
        %v665 = vand.u32 %v146, 4294901760
        %666 = vmatpush1.msra.mxu0 %v665
        %667 = vmatprep.subr.mxu0 0.0
        %v668 = vand.u32 %v147, 4294901760
        %669 = vmatpush1.msra.mxu0 %v668
        %670 = vmatprep.subr.mxu0 0.0
        %v671 = vand.u32 %v148, 4294901760
        %672 = vmatpush1.msra.mxu0 %v671
        %673 = vmatprep.subr.mxu0 0.0
        %v674 = vand.u32 %v149, 4294901760
        %675 = vmatpush1.msra.mxu0 %v674
        %676 = vmatprep.subr.mxu0 0.0
        %v677 = vand.u32 %v150, 4294901760
        %678 = vmatpush1.msra.mxu0 %v677
        %679 = vmatprep.subr.mxu0 0.0
        %v680 = vand.u32 %v151, 4294901760
        %681 = vmatpush1.msra.mxu0 %v680
        %682 = vmatprep.subr.mxu0 0.0
        %v683 = vand.u32 %v152, 4294901760
        %684 = vmatpush1.msra.mxu0 %v683
        %685 = vmatprep.subr.mxu0 0.0
        %v686 = vand.u32 %v153, 4294901760
        %687 = vmatpush1.msra.mxu0 %v686
        %688 = vmatprep.subr.mxu0 0.0
        %v689 = vand.u32 %v154, 4294901760
        %690 = vmatpush1.msra.mxu0 %v689
        %691 = vmatprep.subr.mxu0 0.0
        %v692 = vand.u32 %v155, 4294901760
        %693 = vmatpush1.msra.mxu0 %v692
        %694 = vmatprep.subr.mxu0 0.0
        %v695 = vand.u32 %v156, 4294901760
        %696 = vmatpush1.msra.mxu0 %v695
        %697 = vmatprep.subr.mxu0 0.0
        %v698 = vand.u32 %v157, 4294901760
        %699 = vmatpush1.msra.mxu0 %v698
        %700 = vmatprep.subr.mxu0 0.0
        %v701 = vand.u32 %v158, 4294901760
        %702 = vmatpush1.msra.mxu0 %v701
        %703 = vmatprep.subr.mxu0 0.0
        %v704 = vand.u32 %v159, 4294901760
        %705 = vmatpush1.msra.mxu0 %v704
        %706 = vmatprep.subr.mxu0 0.0
        %v707 = vand.u32 %v160, 4294901760
        %708 = vmatpush1.msra.mxu0 %v707
        %709 = vmatprep.subr.mxu0 0.0
        %v710 = vand.u32 %v161, 4294901760
        %711 = vmatpush1.msra.mxu0 %v710
        %712 = vmatprep.subr.mxu0 0.0
        %v713 = vand.u32 %v162, 4294901760
        %714 = vmatpush1.msra.mxu0 %v713
        %715 = vmatprep.subr.mxu0 0.0
        %v716 = vand.u32 %v163, 4294901760
        %717 = vmatpush1.msra.mxu0 %v716
        %718 = vmatprep.subr.mxu0 0.0
        %v719 = vand.u32 %v164, 4294901760
        %720 = vmatpush1.msra.mxu0 %v719
        %721 = vmatprep.subr.mxu0 0.0
        %v722 = vand.u32 %v165, 4294901760
        %723 = vmatpush1.msra.mxu0 %v722
        %724 = vmatprep.subr.mxu0 0.0
        %v725 = vand.u32 %v166, 4294901760
        %726 = vmatpush1.msra.mxu0 %v725
        %727 = vmatprep.subr.mxu0 0.0
        %v728 = vand.u32 %v167, 4294901760
        %729 = vmatpush1.msra.mxu0 %v728
        %730 = vmatprep.subr.mxu0 0.0
        %v731 = vand.u32 %v168, 4294901760
        %732 = vmatpush1.msra.mxu0 %v731
        %733 = vmatprep.subr.mxu0 0.0
        %v734 = vand.u32 %v169, 4294901760
        %735 = vmatpush1.msra.mxu0 %v734
        %736 = vmatprep.subr.mxu0 0.0
        %v737 = vand.u32 %v170, 4294901760
        %738 = vmatpush1.msra.mxu0 %v737
        %739 = vmatprep.subr.mxu0 0.0
        %v740 = vand.u32 %v171, 4294901760
        %741 = vmatpush1.msra.mxu0 %v740
        %742 = vmatprep.subr.mxu0 0.0
        %v743 = vand.u32 %v172, 4294901760
        %744 = vmatpush1.msra.mxu0 %v743
        %745 = vmatprep.subr.mxu0 0.0
        %v746 = vand.u32 %v173, 4294901760
        %747 = vmatpush1.msra.mxu0 %v746
        %748 = vmatprep.subr.mxu0 0.0
        %v749 = vand.u32 %v174, 4294901760
        %750 = vmatpush1.msra.mxu0 %v749
        %751 = vmatprep.subr.mxu0 0.0
        %v752 = vand.u32 %v175, 4294901760
        %753 = vmatpush1.msra.mxu0 %v752
        %v754 = vand.u32 %v143, 4294901760
        %v755 = vsub.f32 %v143, %v754
        %v756 = vand.u32 %v755, 4294901760
        %757 = vmatprep.mubr.f32.mxu0 %v756
        %v758 = vand.u32 %v142, 4294901760
        %v759 = vsub.f32 %v142, %v758
        %v760 = vand.u32 %v759, 4294901760
        %761 = vmatmul.mubr.f32.gmra.mrb[0].mxu0 %v760
        %v762 = vpop.f32.mrb[0].mxu0
        %v763 = vadd.f32 %v655, %v762
        %v764 = vpop.f32.mrb[0].mxu0
        %765 = vdwg.mxu0
        %766 = vmatprep.subr.mxu0 0.0
        %v767 = vand.u32 %v144, 4294901760
        %v768 = vsub.f32 %v144, %v767
        %v769 = vand.u32 %v768, 4294901760
        %770 = vmatpush1.msra.mxu0 %v769
        %771 = vmatprep.subr.mxu0 0.0
        %v772 = vand.u32 %v145, 4294901760
        %v773 = vsub.f32 %v145, %v772
        %v774 = vand.u32 %v773, 4294901760
        %775 = vmatpush1.msra.mxu0 %v774
        %776 = vmatprep.subr.mxu0 0.0
        %v777 = vand.u32 %v146, 4294901760
        %v778 = vsub.f32 %v146, %v777
        %v779 = vand.u32 %v778, 4294901760
        %780 = vmatpush1.msra.mxu0 %v779
        %781 = vmatprep.subr.mxu0 0.0
        %v782 = vand.u32 %v147, 4294901760
        %v783 = vsub.f32 %v147, %v782
        %v784 = vand.u32 %v783, 4294901760
        %785 = vmatpush1.msra.mxu0 %v784
        %786 = vmatprep.subr.mxu0 0.0
        %v787 = vand.u32 %v148, 4294901760
        %v788 = vsub.f32 %v148, %v787
        %v789 = vand.u32 %v788, 4294901760
        %790 = vmatpush1.msra.mxu0 %v789
        %791 = vmatprep.subr.mxu0 0.0
        %v792 = vand.u32 %v149, 4294901760
        %v793 = vsub.f32 %v149, %v792
        %v794 = vand.u32 %v793, 4294901760
        %795 = vmatpush1.msra.mxu0 %v794
        %796 = vmatprep.subr.mxu0 0.0
        %v797 = vand.u32 %v150, 4294901760
        %v798 = vsub.f32 %v150, %v797
        %v799 = vand.u32 %v798, 4294901760
        %800 = vmatpush1.msra.mxu0 %v799
        %801 = vmatprep.subr.mxu0 0.0
        %v802 = vand.u32 %v151, 4294901760
        %v803 = vsub.f32 %v151, %v802
        %v804 = vand.u32 %v803, 4294901760
        %805 = vmatpush1.msra.mxu0 %v804
        %806 = vmatprep.subr.mxu0 0.0
        %v807 = vand.u32 %v152, 4294901760
        %v808 = vsub.f32 %v152, %v807
        %v809 = vand.u32 %v808, 4294901760
        %810 = vmatpush1.msra.mxu0 %v809
        %811 = vmatprep.subr.mxu0 0.0
        %v812 = vand.u32 %v153, 4294901760
        %v813 = vsub.f32 %v153, %v812
        %v814 = vand.u32 %v813, 4294901760
        %815 = vmatpush1.msra.mxu0 %v814
        %816 = vmatprep.subr.mxu0 0.0
        %v817 = vand.u32 %v154, 4294901760
        %v818 = vsub.f32 %v154, %v817
        %v819 = vand.u32 %v818, 4294901760
        %820 = vmatpush1.msra.mxu0 %v819
        %821 = vmatprep.subr.mxu0 0.0
        %v822 = vand.u32 %v155, 4294901760
        %v823 = vsub.f32 %v155, %v822
        %v824 = vand.u32 %v823, 4294901760
        %825 = vmatpush1.msra.mxu0 %v824
        %826 = vmatprep.subr.mxu0 0.0
        %v827 = vand.u32 %v156, 4294901760
        %v828 = vsub.f32 %v156, %v827
        %v829 = vand.u32 %v828, 4294901760
        %830 = vmatpush1.msra.mxu0 %v829
        %831 = vmatprep.subr.mxu0 0.0
        %v832 = vand.u32 %v157, 4294901760
        %v833 = vsub.f32 %v157, %v832
        %v834 = vand.u32 %v833, 4294901760
        %835 = vmatpush1.msra.mxu0 %v834
        %836 = vmatprep.subr.mxu0 0.0
        %v837 = vand.u32 %v158, 4294901760
        %v838 = vsub.f32 %v158, %v837
        %v839 = vand.u32 %v838, 4294901760
        %840 = vmatpush1.msra.mxu0 %v839
        %841 = vmatprep.subr.mxu0 0.0
        %v842 = vand.u32 %v159, 4294901760
        %v843 = vsub.f32 %v159, %v842
        %v844 = vand.u32 %v843, 4294901760
        %845 = vmatpush1.msra.mxu0 %v844
        %846 = vmatprep.subr.mxu0 0.0
        %v847 = vand.u32 %v160, 4294901760
        %v848 = vsub.f32 %v160, %v847
        %v849 = vand.u32 %v848, 4294901760
        %850 = vmatpush1.msra.mxu0 %v849
        %851 = vmatprep.subr.mxu0 0.0
        %v852 = vand.u32 %v161, 4294901760
        %v853 = vsub.f32 %v161, %v852
        %v854 = vand.u32 %v853, 4294901760
        %855 = vmatpush1.msra.mxu0 %v854
        %856 = vmatprep.subr.mxu0 0.0
        %v857 = vand.u32 %v162, 4294901760
        %v858 = vsub.f32 %v162, %v857
        %v859 = vand.u32 %v858, 4294901760
        %860 = vmatpush1.msra.mxu0 %v859
        %861 = vmatprep.subr.mxu0 0.0
        %v862 = vand.u32 %v163, 4294901760
        %v863 = vsub.f32 %v163, %v862
        %v864 = vand.u32 %v863, 4294901760
        %865 = vmatpush1.msra.mxu0 %v864
        %866 = vmatprep.subr.mxu0 0.0
        %v867 = vand.u32 %v164, 4294901760
        %v868 = vsub.f32 %v164, %v867
        %v869 = vand.u32 %v868, 4294901760
        %870 = vmatpush1.msra.mxu0 %v869
        %871 = vmatprep.subr.mxu0 0.0
        %v872 = vand.u32 %v165, 4294901760
        %v873 = vsub.f32 %v165, %v872
        %v874 = vand.u32 %v873, 4294901760
        %875 = vmatpush1.msra.mxu0 %v874
        %876 = vmatprep.subr.mxu0 0.0
        %v877 = vand.u32 %v166, 4294901760
        %v878 = vsub.f32 %v166, %v877
        %v879 = vand.u32 %v878, 4294901760
        %880 = vmatpush1.msra.mxu0 %v879
        %881 = vmatprep.subr.mxu0 0.0
        %v882 = vand.u32 %v167, 4294901760
        %v883 = vsub.f32 %v167, %v882
        %v884 = vand.u32 %v883, 4294901760
        %885 = vmatpush1.msra.mxu0 %v884
        %886 = vmatprep.subr.mxu0 0.0
        %v887 = vand.u32 %v168, 4294901760
        %v888 = vsub.f32 %v168, %v887
        %v889 = vand.u32 %v888, 4294901760
        %890 = vmatpush1.msra.mxu0 %v889
        %891 = vmatprep.subr.mxu0 0.0
        %v892 = vand.u32 %v169, 4294901760
        %v893 = vsub.f32 %v169, %v892
        %v894 = vand.u32 %v893, 4294901760
        %895 = vmatpush1.msra.mxu0 %v894
        %896 = vmatprep.subr.mxu0 0.0
        %v897 = vand.u32 %v170, 4294901760
        %v898 = vsub.f32 %v170, %v897
        %v899 = vand.u32 %v898, 4294901760
        %900 = vmatpush1.msra.mxu0 %v899
        %901 = vmatprep.subr.mxu0 0.0
        %v902 = vand.u32 %v171, 4294901760
        %v903 = vsub.f32 %v171, %v902
        %v904 = vand.u32 %v903, 4294901760
        %905 = vmatpush1.msra.mxu0 %v904
        %906 = vmatprep.subr.mxu0 0.0
        %v907 = vand.u32 %v172, 4294901760
        %v908 = vsub.f32 %v172, %v907
        %v909 = vand.u32 %v908, 4294901760
        %910 = vmatpush1.msra.mxu0 %v909
        %911 = vmatprep.subr.mxu0 0.0
        %v912 = vand.u32 %v173, 4294901760
        %v913 = vsub.f32 %v173, %v912
        %v914 = vand.u32 %v913, 4294901760
        %915 = vmatpush1.msra.mxu0 %v914
        %916 = vmatprep.subr.mxu0 0.0
        %v917 = vand.u32 %v174, 4294901760
        %v918 = vsub.f32 %v174, %v917
        %v919 = vand.u32 %v918, 4294901760
        %920 = vmatpush1.msra.mxu0 %v919
        %921 = vmatprep.subr.mxu0 0.0
        %v922 = vand.u32 %v175, 4294901760
        %v923 = vsub.f32 %v175, %v922
        %v924 = vand.u32 %v923, 4294901760
        %925 = vmatpush1.msra.mxu0 %v924
        %v926 = vand.u32 %v143, 4294901760
        %927 = vmatprep.mubr.f32.mxu0 %v926
        %v928 = vand.u32 %v142, 4294901760
        %929 = vmatmul.mubr.f32.gmra.mrb[0].mxu0 %v928
        %v930 = vpop.f32.mrb[0].mxu0
        %v931 = vadd.f32 %v763, %v930
        %v932 = vpop.f32.mrb[0].mxu0
        %933 = vdwg.mxu0
        %934 = vmatprep.subr.mxu0 0.0
        %v935 = vand.u32 %v144, 4294901760
        %936 = vmatpush1.msra.mxu0 %v935
        %937 = vmatprep.subr.mxu0 0.0
        %v938 = vand.u32 %v145, 4294901760
        %939 = vmatpush1.msra.mxu0 %v938
        %940 = vmatprep.subr.mxu0 0.0
        %v941 = vand.u32 %v146, 4294901760
        %942 = vmatpush1.msra.mxu0 %v941
        %943 = vmatprep.subr.mxu0 0.0
        %v944 = vand.u32 %v147, 4294901760
        %945 = vmatpush1.msra.mxu0 %v944
        %946 = vmatprep.subr.mxu0 0.0
        %v947 = vand.u32 %v148, 4294901760
        %948 = vmatpush1.msra.mxu0 %v947
        %949 = vmatprep.subr.mxu0 0.0
        %v950 = vand.u32 %v149, 4294901760
        %951 = vmatpush1.msra.mxu0 %v950
        %952 = vmatprep.subr.mxu0 0.0
        %v953 = vand.u32 %v150, 4294901760
        %954 = vmatpush1.msra.mxu0 %v953
        %955 = vmatprep.subr.mxu0 0.0
        %v956 = vand.u32 %v151, 4294901760
        %957 = vmatpush1.msra.mxu0 %v956
        %958 = vmatprep.subr.mxu0 0.0
        %v959 = vand.u32 %v152, 4294901760
        %960 = vmatpush1.msra.mxu0 %v959
        %961 = vmatprep.subr.mxu0 0.0
        %v962 = vand.u32 %v153, 4294901760
        %963 = vmatpush1.msra.mxu0 %v962
        %964 = vmatprep.subr.mxu0 0.0
        %v965 = vand.u32 %v154, 4294901760
        %966 = vmatpush1.msra.mxu0 %v965
        %967 = vmatprep.subr.mxu0 0.0
        %v968 = vand.u32 %v155, 4294901760
        %969 = vmatpush1.msra.mxu0 %v968
        %970 = vmatprep.subr.mxu0 0.0
        %v971 = vand.u32 %v156, 4294901760
        %972 = vmatpush1.msra.mxu0 %v971
        %973 = vmatprep.subr.mxu0 0.0
        %v974 = vand.u32 %v157, 4294901760
        %975 = vmatpush1.msra.mxu0 %v974
        %976 = vmatprep.subr.mxu0 0.0
        %v977 = vand.u32 %v158, 4294901760
        %978 = vmatpush1.msra.mxu0 %v977
        %979 = vmatprep.subr.mxu0 0.0
        %v980 = vand.u32 %v159, 4294901760
        %981 = vmatpush1.msra.mxu0 %v980
        %982 = vmatprep.subr.mxu0 0.0
        %v983 = vand.u32 %v160, 4294901760
        %984 = vmatpush1.msra.mxu0 %v983
        %985 = vmatprep.subr.mxu0 0.0
        %v986 = vand.u32 %v161, 4294901760
        %987 = vmatpush1.msra.mxu0 %v986
        %988 = vmatprep.subr.mxu0 0.0
        %v989 = vand.u32 %v162, 4294901760
        %990 = vmatpush1.msra.mxu0 %v989
        %991 = vmatprep.subr.mxu0 0.0
        %v992 = vand.u32 %v163, 4294901760
        %993 = vmatpush1.msra.mxu0 %v992
        %994 = vmatprep.subr.mxu0 0.0
        %v995 = vand.u32 %v164, 4294901760
        %996 = vmatpush1.msra.mxu0 %v995
        %997 = vmatprep.subr.mxu0 0.0
        %v998 = vand.u32 %v165, 4294901760
        %999 = vmatpush1.msra.mxu0 %v998
        %1000 = vmatprep.subr.mxu0 0.0
        %v1001 = vand.u32 %v166, 4294901760
        %1002 = vmatpush1.msra.mxu0 %v1001
        %1003 = vmatprep.subr.mxu0 0.0
        %v1004 = vand.u32 %v167, 4294901760
        %1005 = vmatpush1.msra.mxu0 %v1004
        %1006 = vmatprep.subr.mxu0 0.0
        %v1007 = vand.u32 %v168, 4294901760
        %1008 = vmatpush1.msra.mxu0 %v1007
        %1009 = vmatprep.subr.mxu0 0.0
        %v1010 = vand.u32 %v169, 4294901760
        %1011 = vmatpush1.msra.mxu0 %v1010
        %1012 = vmatprep.subr.mxu0 0.0
        %v1013 = vand.u32 %v170, 4294901760
        %1014 = vmatpush1.msra.mxu0 %v1013
        %1015 = vmatprep.subr.mxu0 0.0
        %v1016 = vand.u32 %v171, 4294901760
        %1017 = vmatpush1.msra.mxu0 %v1016
        %1018 = vmatprep.subr.mxu0 0.0
        %v1019 = vand.u32 %v172, 4294901760
        %1020 = vmatpush1.msra.mxu0 %v1019
        %1021 = vmatprep.subr.mxu0 0.0
        %v1022 = vand.u32 %v173, 4294901760
        %1023 = vmatpush1.msra.mxu0 %v1022
        %1024 = vmatprep.subr.mxu0 0.0
        %v1025 = vand.u32 %v174, 4294901760
        %1026 = vmatpush1.msra.mxu0 %v1025
        %1027 = vmatprep.subr.mxu0 0.0
        %v1028 = vand.u32 %v175, 4294901760
        %1029 = vmatpush1.msra.mxu0 %v1028
        %v1030 = vand.u32 %v143, 4294901760
        %1031 = vmatprep.mubr.f32.mxu0 %v1030
        %v1032 = vand.u32 %v142, 4294901760
        %1033 = vmatmul.mubr.f32.gmra.mrb[0].mxu0 %v1032
        %v1034 = vpop.f32.mrb[0].mxu0
        %v1035 = vadd.f32 %v931, %v1034
        %v1036 = vpop.f32.mrb[0].mxu0
        %1037 = vdwg.mxu0
        %vm1038 = vcmask 523264
        %1039 = vst.msk [vmem:[%s136] sm:$0xff] %vm1038, %v1035
        %s1040 = scalar_lea.vmem %s136, 8 [#allocation2]
        %1041 = vst.msk [vmem:[%s1040] sm:$0xff] %vm1038, 0.0
        %s1042 = sand.u32 %s71, 1
        %s1043 = scalar_lea.sflag [#allocation3], %s1042
        %s1044 = sand.u32 %s71, 1
        %s1045 = smul.addr %s1044, 16
        %s1046 = scalar_lea.vmem [#allocation2], %s1045
        // Predicated region
        $region29: #{tpu_custom_call.1} parent=27 // pred_check
          %p1047 = pneg %p81
        $region30: #{tpu_custom_call.1} parent=27 // pred_check_branch
          %1049 = sbr.rel (%p1047) target = $region32
        $region31: #{tpu_custom_call.1} parent=27 // pred_region
          %s1051 = ssub.s32 256, 256
          %1052 = vsyncadd %s1043, %s1051
          %s1053 = smul.addr %s16, 2
          %s1054 = smul.addr %s1053, 128
          %s1055 = scalar_lea.hbm %s2, %s1054
          %s1056 = sshll.u32 %s1046, 4
          %s1057 = int_to_ptr.vmem [resolvable:$true] %s1056
          %1062 = dma.vmem_to_hbm [thread:$0]  %s1057, 256, %s1055, %s1043, 128, 128, 8
        $region32: #{tpu_custom_call.1} parent=27 // pred_fallthru
          _
      $region28: #{tpu_custom_call.1} parent=5 // pred_fallthru
        _
      %p1063 = scmp.le.s32.totalorder 2, %s11
      // Predicated region
      $region33: #{tpu_custom_call.1} parent=5 // pred_check
        %p1064 = pneg %p1063
      $region34: #{tpu_custom_call.1} parent=5 // pred_check_branch
        %1066 = sbr.rel (%p1064) target = $region36
      $region35: #{tpu_custom_call.1} parent=5 // pred_region
        %s1067 = ssub.s32 %s11, 2
        // Predicated region
        $region37: #{tpu_custom_call.1} parent=35 // pred_check
          %p1068 = pneg %p87
        $region38: #{tpu_custom_call.1} parent=35 // pred_check_branch
          %1070 = sbr.rel (%p1068) target = $region40
        $region39: #{tpu_custom_call.1} parent=35 // pred_region
          %s1071 = sand.u32 %s72, 1
          %s1072 = scalar_lea.sflag [#allocation3], %s1071
          %s1073 = sand.u32 %s72, 1
          %s1074 = smul.addr %s1073, 16
          %s1075 = scalar_lea.vmem [#allocation2], %s1074
          %1076 = dma.done %s1072, 256
        $region40: #{tpu_custom_call.1} parent=35 // pred_fallthru
          _
      $region36: #{tpu_custom_call.1} parent=5 // pred_fallthru
        _
    $region6: #{tpu_custom_call.1} parent=1 // loop_footer
      %s15 = sadd.s32 1, %s11
    $region7: #{tpu_custom_call.1} parent=1 // loop_footer_branch
      %10 = sbr.rel target = $region3
    $region8: #{tpu_custom_call.1} parent=1 // loop_exit
      _
    %1077 = vsyncpa [#allocation3], 1
    %s1078 = scalar_lea.sflag [#allocation3], 1
    %1079 = vsyncpa %s1078, 1

</llo_original>
